<compile_context>
chip_gen: v6e
topology: v6e:2x2x1
jax: 0.10.0
libtpu: 0.0.40
codegen_flags: <defaults>
</compile_context>

<pallas_src>
import functools

import jax
import jax.numpy as jnp
from jax import lax
from jax.experimental import pallas as pl
from jax.experimental.pallas import tpu as pltpu


def _voxelize_kernel(params_ref, feat_ref, pts_ref, vox_ref, ncoords_ref,
                     acc_ref, *, resolution, v_pad, n_channels):
    R = resolution
    C = n_channels
    n_step = pl.program_id(1)
    n_last = pl.num_programs(1) - 1

    # ---- init resident accumulator at the start of every batch's reduction ----
    @pl.when(n_step == 0)
    def _init():
        acc_ref[...] = jnp.zeros_like(acc_ref)

    # ---- per-batch normalization params (precomputed, tiny) ----
    prm = params_ref[0].astype(jnp.float32)              # [1, 4]
    mean = prm[:, 0:3]                                    # [1, 3]
    scale = prm[:, 3:4]                                   # [1, 1]

    # ---- normalize this tile of points (point-major: [tile_n, 3]) ----
    pts = pts_ref[0].astype(jnp.float32)                  # [tn, 3]
    nc = (pts - mean) * scale + 0.5
    nc = jnp.clip(nc * R, 0.0, float(R - 1))
    ncoords_ref[0] = nc.astype(ncoords_ref.dtype)

    # ---- flat voxel index, already on sublanes -> one-hot as [tn, V_pad] ----
    vox = jnp.round(nc).astype(jnp.int32)                 # [tn, 3]
    idx = vox[:, 0:1] * (R * R) + vox[:, 1:2] * R + vox[:, 2:3]   # [tn, 1]

    tn = pts.shape[0]
    v_ids = lax.broadcasted_iota(jnp.int32, (tn, v_pad), 1)
    feats = feat_ref[0]                                    # [C+1, tn] (last row = ones)
    onehot = (v_ids == idx).astype(feats.dtype)            # exact 0/1 (bf16-safe)

    # ---- one natural [C+1, tn] x [tn, V_pad] MXU matmul: sums AND counts ----
    acc_ref[...] += lax.dot_general(
        feats, onehot, (((1,), (0,)), ((), ())),
        preferred_element_type=jnp.float32)                # [C+1, V_pad]

    # ---- finalize: mean = sums / counts, lane-dense store ----
    @pl.when(n_step == n_last)
    def _finalize():
        acc = acc_ref[...]
        cnt = acc[C:C + 1, :]                               # [1, V_pad]
        inv = pl.reciprocal(jnp.maximum(cnt, 1.0))          # exact; once per batch
        vox_ref[0] = (acc[0:C, :] * inv).astype(vox_ref.dtype)


def _round_up(x, m):
    return ((x + m - 1) // m) * m


def _choose_tile_n(n, v_pad, itemsize, budget_bytes=8 * 1024 * 1024):
    """Largest multiple-of-128 divisor of n whose one-hot tile fits the budget."""
    if n <= 256:
        return n
    for t in (2048, 1024, 512, 384, 256, 128):
        if t <= n and n % t == 0 and t * v_pad * itemsize <= budget_bytes:
            return t
    for t in (128, 256, 384, 512):
        if t <= n and n % t == 0:
            return t
    return n


def proxy_voxel_conv(features, coords, *, resolution, normalize=True, eps=0.0,
                     tile_n=None):
    """Pallas implementation of ProxyVoxelConv.forward (PVCNN Voxelization)."""
    B, C, N = features.shape
    assert coords.shape == (B, 3, N), coords.shape
    R = int(resolution)
    V = R * R * R
    v_pad = _round_up(V, 128)                 # lane-dense output / one-hot width

    feat_bytes = features.dtype.itemsize
    if tile_n is None:
        tile_n = _choose_tile_n(N, v_pad, feat_bytes)
    if tile_n != N:
        assert N % tile_n == 0 and tile_n % 128 == 0, (N, tile_n)
    n_tiles = N // tile_n

    # ---- cheap JAX glue: per-batch mean / scale (global reductions over N,
    #      cannot live inside the N-tiled reduction grid) ----
    coords_f32 = coords.astype(jnp.float32)
    mean = jnp.mean(coords_f32, axis=2, keepdims=True)                 # [B,3,1]
    if normalize:
        centered = coords_f32 - mean
        norms = jnp.sqrt(jnp.sum(centered * centered, axis=1, keepdims=True))
        # NOTE: eps=0 with degenerate (all-identical) points divides by zero,
        # exactly like the PyTorch module it mirrors.
        scale = 1.0 / (jnp.max(norms, axis=2, keepdims=True) * 2.0 + eps)
    else:
        scale = jnp.full((B, 1, 1), 0.5, jnp.float32)
    params = jnp.concatenate([jnp.swapaxes(mean, 1, 2), scale], axis=2)  # [B,1,4]

    # append a ones channel so per-voxel counts ride the same MXU contraction
    feats_aug = jnp.concatenate(
        [features, jnp.ones((B, 1, N), features.dtype)], axis=1)        # [B,C+1,N]

    # layout plumbing: point-major coords so the voxel index sits on sublanes
    pts = jnp.swapaxes(coords_f32, 1, 2)                                 # [B,N,3]

    kernel = functools.partial(_voxelize_kernel, resolution=R, v_pad=v_pad,
                               n_channels=C)

    # rough VMEM need -> explicit limit, clamped to stay safe on v7x (64 MiB)
    need = (2 * tile_n * v_pad * max(feat_bytes, 4)          # one-hot temporaries
            + (C + 1) * v_pad * 4                            # accumulator
            + 2 * ((C + 1) * tile_n * feat_bytes + tile_n * 128 * 4 + 8 * 128 * 4)
            + 2 * (C * v_pad * feat_bytes + tile_n * 128 * 4))
    vmem_limit = int(min(48 * 1024 * 1024, max(32 * 1024 * 1024, 2 * need)))

    vox_flat, ncoords_t = pl.pallas_call(
        kernel,
        out_shape=(
            jax.ShapeDtypeStruct((B, C, v_pad), features.dtype),
            jax.ShapeDtypeStruct((B, N, 3), jnp.float32),
        ),
        grid_spec=pltpu.PrefetchScalarGridSpec(
            num_scalar_prefetch=0,
            grid=(B, n_tiles),
            in_specs=[
                pl.BlockSpec((1, 1, 4), lambda b, n: (b, 0, 0)),           # params
                pl.BlockSpec((1, C + 1, tile_n), lambda b, n: (b, 0, n)),  # feats+1s
                pl.BlockSpec((1, tile_n, 3), lambda b, n: (b, n, 0)),      # points
            ],
            out_specs=(
                pl.BlockSpec((1, C, v_pad), lambda b, n: (b, 0, 0)),       # voxels
                pl.BlockSpec((1, tile_n, 3), lambda b, n: (b, n, 0)),      # norm coords
            ),
            scratch_shapes=[
                pltpu.VMEM((C + 1, v_pad), jnp.float32),   # sums + counts accumulator
            ],
        ),
        compiler_params=pltpu.CompilerParams(
            dimension_semantics=("parallel", "arbitrary"),
            vmem_limit_bytes=vmem_limit,
        ),
    )(params, feats_aug, pts)

    voxel_features = vox_flat[:, :, :V].reshape(B, C, R, R, R)
    voxel_coords = jnp.swapaxes(ncoords_t, 1, 2).astype(coords.dtype)
    return voxel_features, voxel_coords


# ---------------- plain-JAX references for correctness checks ----------------
def _reference_normalized_coords(coords, resolution, normalize=True, eps=0.0):
    R = resolution
    mean = coords.mean(axis=2, keepdims=True)
    nc = coords - mean
    if normalize:
        norms = jnp.sqrt(jnp.sum(nc * nc, axis=1, keepdims=True))
        nc = nc / (norms.max(axis=2, keepdims=True) * 2.0 + eps) + 0.5
    else:
        nc = (nc + 1.0) * 0.5
    return jnp.clip(nc * R, 0.0, R - 1)


def _reference_scatter_mean(features, norm_coords, resolution):
    B, C, N = features.shape
    R = resolution
    V = R * R * R
    vox = jnp.round(norm_coords).astype(jnp.int32)
    idx = vox[:, 0] * (R * R) + vox[:, 1] * R + vox[:, 2]              # [B, N]
    onehot = jax.nn.one_hot(idx, V, dtype=jnp.float32)                 # [B, N, V]
    sums = jnp.einsum('bcn,bnv->bcv', features.astype(jnp.float32), onehot)
    counts = jnp.maximum(jnp.sum(onehot, axis=1)[:, None, :], 1.0)     # [B, 1, V]
    return (sums / counts).reshape(B, C, R, R, R)


if __name__ == "__main__":
    # ProxyVoxelConv(in_channels=4, out_channels=8, kernel_size=3, resolution=4):
    # the forward pass only uses Voxelization (no learnable parameters).
    B, C, N, R = 2, 4, 512, 4

    key = jax.random.PRNGKey(0)
    kf, kc = jax.random.split(key)
    # bf16-exact feature values keep any MXU bf16-pass truncation exact, so the
    # check below isolates kernel logic (indices / counts / accumulation).
    features = jax.random.normal(kf, (B, C, N), dtype=jnp.float32)
    features = features.astype(jnp.bfloat16).astype(jnp.float32)
    coords = jax.random.normal(kc, (B, 3, N), dtype=jnp.float32)

    # tile_n=256 -> 2 reduction steps per batch, exercising init/accum/finalize.
    fwd = jax.jit(functools.partial(proxy_voxel_conv, resolution=R,
                                    normalize=True, eps=0.0, tile_n=256))
    voxel_features, voxel_coords = fwd(features, coords)
    jax.block_until_ready((voxel_features, voxel_coords))

    assert voxel_features.shape == (B, C, R, R, R)
    assert voxel_coords.shape == (B, 3, N)

    ref_nc = _reference_normalized_coords(coords, R, normalize=True, eps=0.0)
    assert jnp.allclose(voxel_coords, ref_nc, atol=1e-4, rtol=1e-4), (
        float(jnp.max(jnp.abs(voxel_coords - ref_nc))))

    # The scatter-mean check uses the kernel's (already validated) coords so a
    # 1-ulp rounding-boundary flip cannot cause a spurious voxel mismatch.
    ref_vox = _reference_scatter_mean(features, voxel_coords, R)
    assert jnp.allclose(voxel_features, ref_vox, atol=1e-4, rtol=1e-4), (
        float(jnp.max(jnp.abs(voxel_features - ref_vox))))

    print("KERNEL_OK")
</pallas_src>

<mosaic_0001>
module attributes {stable_mosaic.version = 11 : i64} {
  func.func @_voxelize_kernel(%arg0: i32, %arg1: i32, %arg2: memref<1x1x4xf32, #tpu.memory_space<vmem>>, %arg3: memref<1x5x256xf32, #tpu.memory_space<vmem>>, %arg4: memref<1x256x3xf32, #tpu.memory_space<vmem>>, %arg5: memref<1x4x128xf32, #tpu.memory_space<vmem>>, %arg6: memref<1x256x3xf32, #tpu.memory_space<vmem>>, %arg7: memref<5x128xf32, #tpu.memory_space<vmem>>) attributes {dimension_semantics = [#tpu.dimension_semantics<parallel>, #tpu.dimension_semantics<arbitrary>], iteration_bounds = array<i64: 2, 2>, scalar_prefetch = 0 : i64, scratch_operands = 1 : i64, tpu.core_type = #tpu.core_type<tc>, window_params = [{transform_indices = @transform_0, window_bounds = array<i64: 1, 1, 4>}, {transform_indices = @transform_1, window_bounds = array<i64: 1, 5, 256>}, {transform_indices = @transform_2, window_bounds = array<i64: 1, 256, 3>}, {transform_indices = @transform_3, window_bounds = array<i64: 1, 4, 128>}, {transform_indices = @transform_4, window_bounds = array<i64: 1, 256, 3>}]} {
    %c0_i32 = arith.constant 0 : i32
    %0 = arith.cmpi eq, %arg1, %c0_i32 : i32
    %1 = arith.extui %0 : i1 to i32
    %c0_i32_0 = arith.constant 0 : i32
    %2 = arith.cmpi ne, %1, %c0_i32_0 : i32
    scf.if %2 {
      %cst_21 = arith.constant 0.000000e+00 : f32
      %49 = vector.broadcast %cst_21 : f32 to vector<5x128xf32>
      %c0_22 = arith.constant 0 : index
      %c0_23 = arith.constant 0 : index
      %50 = vector.load %arg7[%c0_22, %c0_23] : memref<5x128xf32, #tpu.memory_space<vmem>>, vector<5x128xf32>
      tpu.vector_store %arg7[%c0_22, %c0_23], %49 {strides = array<i32>} : memref<5x128xf32, #tpu.memory_space<vmem>>, vector<5x128xf32>,
    } else {
    }
    %c0 = arith.constant 0 : index
    %c0_1 = arith.constant 0 : index
    %c0_2 = arith.constant 0 : index
    %3 = vector.load %arg2[%c0, %c0_1, %c0_2] : memref<1x1x4xf32, #tpu.memory_space<vmem>>, vector<1x1x4xf32>
    %4 = vector.shape_cast %3 : vector<1x1x4xf32> to vector<1x4xf32>
    %5 = vector.extract_strided_slice %4 {offsets = [0, 0], sizes = [1, 3], strides = [1, 1]} : vector<1x4xf32> to vector<1x3xf32>
    %6 = vector.extract_strided_slice %4 {offsets = [0, 3], sizes = [1, 1], strides = [1, 1]} : vector<1x4xf32> to vector<1x1xf32>
    %c0_3 = arith.constant 0 : index
    %c0_4 = arith.constant 0 : index
    %c0_5 = arith.constant 0 : index
    %7 = vector.load %arg4[%c0_3, %c0_4, %c0_5] : memref<1x256x3xf32, #tpu.memory_space<vmem>>, vector<1x256x3xf32>
    %8 = vector.shape_cast %7 : vector<1x256x3xf32> to vector<256x3xf32>
    %9 = vector.broadcast %5 : vector<1x3xf32> to vector<256x3xf32>
    %10 = arith.subf %8, %9 : vector<256x3xf32>
    %11 = vector.broadcast %6 : vector<1x1xf32> to vector<256x3xf32>
    %12 = arith.mulf %10, %11 : vector<256x3xf32>
    %cst = arith.constant 5.000000e-01 : f32
    %13 = vector.broadcast %cst : f32 to vector<256x3xf32>
    %14 = arith.addf %12, %13 : vector<256x3xf32>
    %cst_6 = arith.constant 4.000000e+00 : f32
    %15 = vector.broadcast %cst_6 : f32 to vector<256x3xf32>
    %16 = arith.mulf %14, %15 : vector<256x3xf32>
    %cst_7 = arith.constant 0.000000e+00 : f32
    %cst_8 = arith.constant 3.000000e+00 : f32
    %17 = vector.broadcast %cst_7 : f32 to vector<256x3xf32>
    %18 = arith.maximumf %17, %16 : vector<256x3xf32>
    %19 = vector.broadcast %cst_8 : f32 to vector<256x3xf32>
    %20 = arith.minimumf %19, %18 : vector<256x3xf32>
    %c0_9 = arith.constant 0 : index
    %c0_10 = arith.constant 0 : index
    %c0_11 = arith.constant 0 : index
    %21 = vector.load %arg6[%c0_9, %c0_10, %c0_11] : memref<1x256x3xf32, #tpu.memory_space<vmem>>, vector<1x256x3xf32>
    %22 = vector.shape_cast %21 : vector<1x256x3xf32> to vector<256x3xf32>
    %23 = vector.shape_cast %20 : vector<256x3xf32> to vector<1x256x3xf32>
    tpu.vector_store %arg6[%c0_9, %c0_10, %c0_11], %23 {strides = array<i32>} : memref<1x256x3xf32, #tpu.memory_space<vmem>>, vector<1x256x3xf32>,
    %24 = math.roundeven %20 : vector<256x3xf32>
    %25 = arith.fptosi %24 : vector<256x3xf32> to vector<256x3xi32>
    %26 = vector.extract_strided_slice %25 {offsets = [0, 0], sizes = [256, 1], strides = [1, 1]} : vector<256x3xi32> to vector<256x1xi32>
    %c16_i32 = arith.constant 16 : i32
    %27 = vector.broadcast %c16_i32 : i32 to vector<256x1xi32>
    %28 = arith.muli %26, %27 : vector<256x1xi32>
    %29 = vector.extract_strided_slice %25 {offsets = [0, 1], sizes = [256, 1], strides = [1, 1]} : vector<256x3xi32> to vector<256x1xi32>
    %c4_i32 = arith.constant 4 : i32
    %30 = vector.broadcast %c4_i32 : i32 to vector<256x1xi32>
    %31 = arith.muli %29, %30 : vector<256x1xi32>
    %32 = arith.addi %28, %31 : vector<256x1xi32>
    %33 = vector.extract_strided_slice %25 {offsets = [0, 2], sizes = [256, 1], strides = [1, 1]} : vector<256x3xi32> to vector<256x1xi32>
    %34 = arith.addi %32, %33 : vector<256x1xi32>
    %35 = tpu.iota {dimensions = array<i32: 1>} : vector<256x128xi32>
    %c0_12 = arith.constant 0 : index
    %c0_13 = arith.constant 0 : index
    %c0_14 = arith.constant 0 : index
    %36 = vector.load %arg3[%c0_12, %c0_13, %c0_14] : memref<1x5x256xf32, #tpu.memory_space<vmem>>, vector<1x5x256xf32>
    %37 = vector.shape_cast %36 : vector<1x5x256xf32> to vector<5x256xf32>
    %38 = vector.broadcast %34 : vector<256x1xi32> to vector<256x128xi32>
    %39 = arith.cmpi eq, %35, %38 : vector<256x128xi32>
    %40 = arith.extui %39 : vector<256x128xi1> to vector<256x128xi32>
    %41 = arith.sitofp %40 : vector<256x128xi32> to vector<256x128xf32>
    %c0_15 = arith.constant 0 : index
    %c0_16 = arith.constant 0 : index
    %42 = vector.load %arg7[%c0_15, %c0_16] : memref<5x128xf32, #tpu.memory_space<vmem>>, vector<5x128xf32>
    %cst_17 = arith.constant dense<0.000000e+00> : vector<5x128xf32>
    %43 = tpu.matmul %37, %41, %cst_17 {dimension_numbers = #tpu.dot_dimension_numbers<[1], [0], [0], [1], [0, 0, 1, 1], [], []>} : vector<5x256xf32>, vector<256x128xf32>, vector<5x128xf32> -> vector<5x128xf32>
    %44 = arith.addf %42, %43 : vector<5x128xf32>
    %c0_18 = arith.constant 0 : index
    %c0_19 = arith.constant 0 : index
    %45 = vector.load %arg7[%c0_18, %c0_19] : memref<5x128xf32, #tpu.memory_space<vmem>>, vector<5x128xf32>
    tpu.vector_store %arg7[%c0_18, %c0_19], %44 {strides = array<i32>} : memref<5x128xf32, #tpu.memory_space<vmem>>, vector<5x128xf32>,
    %c1_i32 = arith.constant 1 : i32
    %46 = arith.cmpi eq, %arg1, %c1_i32 : i32
    %47 = arith.extui %46 : i1 to i32
    %c0_i32_20 = arith.constant 0 : i32
    %48 = arith.cmpi ne, %47, %c0_i32_20 : i32
    scf.if %48 {
      %c0_21 = arith.constant 0 : index
      %c0_22 = arith.constant 0 : index
      %49 = vector.load %arg7[%c0_21, %c0_22] : memref<5x128xf32, #tpu.memory_space<vmem>>, vector<5x128xf32>
      %50 = vector.extract_strided_slice %49 {offsets = [4, 0], sizes = [1, 128], strides = [1, 1]} : vector<5x128xf32> to vector<1x128xf32>
      %cst_23 = arith.constant 1.000000e+00 : f32
      %51 = vector.broadcast %cst_23 : f32 to vector<1x128xf32>
      %52 = arith.maximumf %50, %51 : vector<1x128xf32>
      %53 = tpu.reciprocal %52 : vector<1x128xf32> -> vector<1x128xf32>
      %54 = vector.extract_strided_slice %49 {offsets = [0, 0], sizes = [4, 128], strides = [1, 1]} : vector<5x128xf32> to vector<4x128xf32>
      %55 = vector.broadcast %53 : vector<1x128xf32> to vector<4x128xf32>
      %56 = arith.mulf %54, %55 : vector<4x128xf32>
      %c0_24 = arith.constant 0 : index
      %c0_25 = arith.constant 0 : index
      %c0_26 = arith.constant 0 : index
      %57 = vector.load %arg5[%c0_24, %c0_25, %c0_26] : memref<1x4x128xf32, #tpu.memory_space<vmem>>, vector<1x4x128xf32>
      %58 = vector.shape_cast %57 : vector<1x4x128xf32> to vector<4x128xf32>
      %59 = vector.shape_cast %56 : vector<4x128xf32> to vector<1x4x128xf32>
      tpu.vector_store %arg5[%c0_24, %c0_25, %c0_26], %59 {strides = array<i32>} : memref<1x4x128xf32, #tpu.memory_space<vmem>>, vector<1x4x128xf32>,
    } else {
    }
    return
  }
  func.func @transform_0(%arg0: i32, %arg1: i32) -> (i32, i32, i32) {
    %c0_i32 = arith.constant 0 : i32
    %c0_i32_0 = arith.constant 0 : i32
    %c0_i32_1 = arith.constant 0 : i32
    return %arg0, %c0_i32, %c0_i32_0 : i32, i32, i32
  }
  func.func @transform_1(%arg0: i32, %arg1: i32) -> (i32, i32, i32) {
    %c0_i32 = arith.constant 0 : i32
    %c0_i32_0 = arith.constant 0 : i32
    return %arg0, %c0_i32, %arg1 : i32, i32, i32
  }
  func.func @transform_2(%arg0: i32, %arg1: i32) -> (i32, i32, i32) {
    %c0_i32 = arith.constant 0 : i32
    %c0_i32_0 = arith.constant 0 : i32
    return %arg0, %arg1, %c0_i32 : i32, i32, i32
  }
  func.func @transform_3(%arg0: i32, %arg1: i32) -> (i32, i32, i32) {
    %c0_i32 = arith.constant 0 : i32
    %c0_i32_0 = arith.constant 0 : i32
    %c0_i32_1 = arith.constant 0 : i32
    return %arg0, %c0_i32, %c0_i32_0 : i32, i32, i32
  }
  func.func @transform_4(%arg0: i32, %arg1: i32) -> (i32, i32, i32) {
    %c0_i32 = arith.constant 0 : i32
    %c0_i32_0 = arith.constant 0 : i32
    return %arg0, %arg1, %c0_i32 : i32, i32, i32
  }
}

</mosaic_0001>

<llo_original>
// kernel: proxy_voxel_conv.1
$region0: #{proxy_voxel_conv.1}
  #allocation0 [shape = 'u32[]', space=smem, size = 0x4, offset = 0x4, fixed_abs, tag = 'smem constant byte address 0x4 - core index']
  #allocation1 [shape = 'u32[144,128]{1,0:T(1,128)}', space=vmem, size = 0x12000, scoped, tag = 'internal scratch']
  #allocation2 [shape = 'f32[5,128]{1,0:T(8,128)}', space=vmem, size = 0x1000, scoped, tag = 'scratch operand']
  %s0 = inlined_call_operand.vmem [shape: f32[2,1,4], index: 0, kind: input, shape index: {}]
  %s1 = inlined_call_operand.vmem [shape: f32[2,5,512], index: 1, kind: input, shape index: {}]
  %s2 = inlined_call_operand.vmem [shape: f32[2,512,3], index: 2, kind: input, shape index: {}]
  %s3 = inlined_call_operand.vmem [shape: f32[2,4,128], index: 3, kind: output, shape index: {0}]
  %s4 = inlined_call_operand.vmem [shape: f32[2,512,3], index: 4, kind: output, shape index: {1}]
  %5 = xla_tuple %s3, %s4
  %s6 = sld [smem:[#allocation0]]
  $region61: #{proxy_voxel_conv.1} parent=0
    _
  %s8 = ssub.s32 1, %s6
  %s9 = scalar_select 0, %s8, %s6
  loop: start=0, step=1, limit=6
  $region2: #{proxy_voxel_conv.1} parent=0 // loop_pre_header
    _
  $region3: #{proxy_voxel_conv.1} parent=0 // loop_header
    %s11 = sphi 0, %s15
    %p12 = scmp.ge.s32.totalorder %s11, 6
    %s18 = sphi 0, %s30
    %s19 = sphi 0, %s26
    %s20 = sphi 0, %s18
    %s21 = sphi 0, %s19
    %s22 = sphi 0, %s20
    %s23 = sphi 0, %s21
    %s33 = sphi 0, %s35
    %s36 = sphi 0, %s33
    %s37 = sphi 0, %s36
    %s53 = sphi 0, %s37
    %s61 = sphi 0, %s63
    %s64 = sphi 0, %s61
    %s65 = sphi 0, %s64
    %s81 = sphi 0, %s65
    %s89 = sphi 0, %s91
    %s92 = sphi 0, %s89
    %s93 = sphi 0, %s92
    %s109 = sphi 0, %s93
    %s115 = sphi 0, %s117
    %s118 = sphi 0, %s115
    %s119 = sphi 0, %s118
    %s135 = sphi 0, %s119
    %s143 = sphi 0, %s145
    %s146 = sphi 0, %s143
    %s147 = sphi 0, %s146
    %s163 = sphi 0, %s147
  $region4: #{proxy_voxel_conv.1} parent=0 // loop_header_branch
    %14 = sbr.rel (%p12) target = $region8
  $region5: #{proxy_voxel_conv.1} parent=0 // loop_body
    %s16 = ssub.s32 %s11, 1
    %s17 = ssub.s32 %s11, 2
    %s24 = sadd.s32 1, %s19
    %p25 = scmp.ge.s32.totalorder %s24, 2
    %s26 = scalar_select %p25, 0, %s24
    %s27 = sadd.s32 1, %s18
    %s28 = scalar_select %p25, %s27, %s18
    %p29 = scmp.ge.s32.totalorder %s28, 2
    %s30 = scalar_select %p29, 0, %s28
    %s31 = ssub.s32 %s18, %s30
    %p32 = scmp.eq.s32.totalorder %s31, 0
    %s34 = sadd.s32 %s33, 1
    %s35 = scalar_select %p32, %s33, %s34
    %p38 = pneg %p32
    %p39 = scmp.eq.s32.totalorder %s11, 3
    %p40 = por %p38, %p39
    %p41 = scmp.ne.s32.totalorder %s33, %s36
    %p42 = scmp.eq.s32.totalorder %s11, 0
    %p43 = por %p41, %p42
    %p44 = scmp.ne.s32.totalorder %s33, %s36
    %p45 = scmp.eq.s32.totalorder %s16, 3
    %p46 = por %p44, %p45
    %p47 = scmp.ne.s32.totalorder %s36, %s37
    %p48 = scmp.eq.s32.totalorder %s16, 0
    %p49 = por %p47, %p48
    %p50 = scmp.ne.s32.totalorder %s36, %s37
    %p51 = scmp.eq.s32.totalorder %s17, 3
    %p52 = por %p50, %p51
    %p54 = scmp.ne.s32.totalorder %s37, %s53
    %p55 = scmp.eq.s32.totalorder %s17, 0
    %p56 = por %p54, %p55
    %s57 = ssub.s32 %s18, %s30
    %s58 = ssub.s32 %s19, %s26
    %s59 = sor.u32 %s57, %s58
    %p60 = scmp.eq.s32.totalorder %s59, 0
    %s62 = sadd.s32 %s61, 1
    %s63 = scalar_select %p60, %s61, %s62
    %p66 = pneg %p60
    %p67 = scmp.eq.s32.totalorder %s11, 3
    %p68 = por %p66, %p67
    %p69 = scmp.ne.s32.totalorder %s61, %s64
    %p70 = scmp.eq.s32.totalorder %s11, 0
    %p71 = por %p69, %p70
    %p72 = scmp.ne.s32.totalorder %s61, %s64
    %p73 = scmp.eq.s32.totalorder %s16, 3
    %p74 = por %p72, %p73
    %p75 = scmp.ne.s32.totalorder %s64, %s65
    %p76 = scmp.eq.s32.totalorder %s16, 0
    %p77 = por %p75, %p76
    %p78 = scmp.ne.s32.totalorder %s64, %s65
    %p79 = scmp.eq.s32.totalorder %s17, 3
    %p80 = por %p78, %p79
    %p82 = scmp.ne.s32.totalorder %s65, %s81
    %p83 = scmp.eq.s32.totalorder %s17, 0
    %p84 = por %p82, %p83
    %s85 = ssub.s32 %s18, %s30
    %s86 = ssub.s32 %s19, %s26
    %s87 = sor.u32 %s85, %s86
    %p88 = scmp.eq.s32.totalorder %s87, 0
    %s90 = sadd.s32 %s89, 1
    %s91 = scalar_select %p88, %s89, %s90
    %p94 = pneg %p88
    %p95 = scmp.eq.s32.totalorder %s11, 3
    %p96 = por %p94, %p95
    %p97 = scmp.ne.s32.totalorder %s89, %s92
    %p98 = scmp.eq.s32.totalorder %s11, 0
    %p99 = por %p97, %p98
    %p100 = scmp.ne.s32.totalorder %s89, %s92
    %p101 = scmp.eq.s32.totalorder %s16, 3
    %p102 = por %p100, %p101
    %p103 = scmp.ne.s32.totalorder %s92, %s93
    %p104 = scmp.eq.s32.totalorder %s16, 0
    %p105 = por %p103, %p104
    %p106 = scmp.ne.s32.totalorder %s92, %s93
    %p107 = scmp.eq.s32.totalorder %s17, 3
    %p108 = por %p106, %p107
    %p110 = scmp.ne.s32.totalorder %s93, %s109
    %p111 = scmp.eq.s32.totalorder %s17, 0
    %p112 = por %p110, %p111
    %s113 = ssub.s32 %s18, %s30
    %p114 = scmp.eq.s32.totalorder %s113, 0
    %s116 = sadd.s32 %s115, 1
    %s117 = scalar_select %p114, %s115, %s116
    %p120 = pneg %p114
    %p121 = scmp.eq.s32.totalorder %s11, 3
    %p122 = por %p120, %p121
    %p123 = scmp.ne.s32.totalorder %s115, %s118
    %p124 = scmp.eq.s32.totalorder %s11, 0
    %p125 = por %p123, %p124
    %p126 = scmp.ne.s32.totalorder %s115, %s118
    %p127 = scmp.eq.s32.totalorder %s16, 3
    %p128 = por %p126, %p127
    %p129 = scmp.ne.s32.totalorder %s118, %s119
    %p130 = scmp.eq.s32.totalorder %s16, 0
    %p131 = por %p129, %p130
    %p132 = scmp.ne.s32.totalorder %s118, %s119
    %p133 = scmp.eq.s32.totalorder %s17, 3
    %p134 = por %p132, %p133
    %p136 = scmp.ne.s32.totalorder %s119, %s135
    %p137 = scmp.eq.s32.totalorder %s17, 0
    %p138 = por %p136, %p137
    %s139 = ssub.s32 %s18, %s30
    %s140 = ssub.s32 %s19, %s26
    %s141 = sor.u32 %s139, %s140
    %p142 = scmp.eq.s32.totalorder %s141, 0
    %s144 = sadd.s32 %s143, 1
    %s145 = scalar_select %p142, %s143, %s144
    %p148 = pneg %p142
    %p149 = scmp.eq.s32.totalorder %s11, 3
    %p150 = por %p148, %p149
    %p151 = scmp.ne.s32.totalorder %s143, %s146
    %p152 = scmp.eq.s32.totalorder %s11, 0
    %p153 = por %p151, %p152
    %p154 = scmp.ne.s32.totalorder %s143, %s146
    %p155 = scmp.eq.s32.totalorder %s16, 3
    %p156 = por %p154, %p155
    %p157 = scmp.ne.s32.totalorder %s146, %s147
    %p158 = scmp.eq.s32.totalorder %s16, 0
    %p159 = por %p157, %p158
    %p160 = scmp.ne.s32.totalorder %s146, %s147
    %p161 = scmp.eq.s32.totalorder %s17, 3
    %p162 = por %p160, %p161
    %p164 = scmp.ne.s32.totalorder %s147, %s163
    %p165 = scmp.eq.s32.totalorder %s17, 0
    %p166 = por %p164, %p165
    %p167 = scmp.le.s32.totalorder 1, %s11
    %p168 = scmp.lt.s32.totalorder %s11, 5
    %p169 = pnand %p167, %p168
    %p170 = pneg %p169
    // Predicated region
    $region9: #{proxy_voxel_conv.1} parent=5 // pred_check
      _
    $region10: #{proxy_voxel_conv.1} parent=5 // pred_check_branch
      %172 = sbr.rel (%p169) target = $region12
    $region11: #{proxy_voxel_conv.1} parent=5 // pred_region
      %s173 = ssub.s32 %s11, 1
    $region12: #{proxy_voxel_conv.1} parent=5 // pred_fallthru
      _
    %p174 = scmp.lt.s32.totalorder %s11, 4
    // Predicated region
    $region13: #{proxy_voxel_conv.1} parent=5 // pred_check
      %p175 = pneg %p174
    $region14: #{proxy_voxel_conv.1} parent=5 // pred_check_branch
      %177 = sbr.rel (%p175) target = $region16
    $region15: #{proxy_voxel_conv.1} parent=5 // pred_region
      // Predicated region
      $region17: #{proxy_voxel_conv.1} parent=15 // pred_check
        %p178 = pneg %p43
      $region18: #{proxy_voxel_conv.1} parent=15 // pred_check_branch
        %180 = sbr.rel (%p178) target = $region20
      $region19: #{proxy_voxel_conv.1} parent=15 // pred_region
        %p181 = scmp.lt.s32.totalorder %s18, 1
        %s182 = scalar_select %p181, %s18, 1
        %s183 = scalar_lea.vmem %s0, %s182
      $region20: #{proxy_voxel_conv.1} parent=15 // pred_fallthru
        _
      // Predicated region
      $region21: #{proxy_voxel_conv.1} parent=15 // pred_check
        %p184 = pneg %p71
      $region22: #{proxy_voxel_conv.1} parent=15 // pred_check_branch
        %186 = sbr.rel (%p184) target = $region24
      $region23: #{proxy_voxel_conv.1} parent=15 // pred_region
        %s187 = smul.u32 2, %s19
        %p188 = scmp.lt.s32.totalorder %s18, 1
        %s189 = scalar_select %p188, %s18, 1
        %p190 = scmp.lt.s32.totalorder %s187, 3
        %s191 = scalar_select %p190, %s187, 3
        %s192 = smul.addr %s189, 4
        %s193 = sadd.s32 %s191, %s192
        %s194 = smul.addr %s193, 8
        %s195 = scalar_lea.vmem %s1, %s194
        %s196 = smul.u32 2, %s19
      $region24: #{proxy_voxel_conv.1} parent=15 // pred_fallthru
        _
      // Predicated region
      $region25: #{proxy_voxel_conv.1} parent=15 // pred_check
        %p197 = pneg %p99
      $region26: #{proxy_voxel_conv.1} parent=15 // pred_check_branch
        %199 = sbr.rel (%p197) target = $region28
      $region27: #{proxy_voxel_conv.1} parent=15 // pred_region
        %s200 = smul.u32 32, %s19
        %p201 = scmp.lt.s32.totalorder %s18, 1
        %s202 = scalar_select %p201, %s18, 1
        %p203 = scmp.lt.s32.totalorder %s200, 63
        %s204 = scalar_select %p203, %s200, 63
        %s205 = smul.addr %s202, 64
        %s206 = sadd.s32 %s204, %s205
        %s207 = smul.addr %s206, 8
        %s208 = scalar_lea.vmem %s2, %s207
        %s209 = smul.u32 32, %s19
      $region28: #{proxy_voxel_conv.1} parent=15 // pred_fallthru
        _
    $region16: #{proxy_voxel_conv.1} parent=5 // pred_fallthru
      _
    %p210 = scmp.le.s32.totalorder 1, %s11
    %p211 = scmp.lt.s32.totalorder %s11, 5
    %p212 = pnand %p210, %p211
    %p213 = pneg %p212
    // Predicated region
    $region29: #{proxy_voxel_conv.1} parent=5 // pred_check
      _
    $region30: #{proxy_voxel_conv.1} parent=5 // pred_check_branch
      %215 = sbr.rel (%p212) target = $region32
    $region31: #{proxy_voxel_conv.1} parent=5 // pred_region
      %s216 = ssub.s32 %s11, 1
      %p217 = scmp.lt.s32.totalorder %s20, 1
      %s218 = scalar_select %p217, %s20, 1
      %s219 = scalar_lea.vmem %s0, %s218
      %p220 = pneg %p49
      %p221 = pneg %p46
      %s222 = smul.u32 2, %s21
      %p223 = scmp.lt.s32.totalorder %s20, 1
      %s224 = scalar_select %p223, %s20, 1
      %p225 = scmp.lt.s32.totalorder %s222, 3
      %s226 = scalar_select %p225, %s222, 3
      %s227 = smul.addr %s224, 4
      %s228 = sadd.s32 %s226, %s227
      %s229 = smul.addr %s228, 8
      %s230 = scalar_lea.vmem %s1, %s229
      %p231 = pneg %p77
      %p232 = pneg %p74
      %s233 = smul.u32 32, %s21
      %p234 = scmp.lt.s32.totalorder %s20, 1
      %s235 = scalar_select %p234, %s20, 1
      %p236 = scmp.lt.s32.totalorder %s233, 63
      %s237 = scalar_select %p236, %s233, 63
      %s238 = smul.addr %s235, 64
      %s239 = sadd.s32 %s237, %s238
      %s240 = smul.addr %s239, 8
      %s241 = scalar_lea.vmem %s2, %s240
      %p242 = pneg %p105
      %p243 = pneg %p102
      %p244 = pneg %p131
      %p245 = pneg %p128
      %p246 = scmp.lt.s32.totalorder %s20, 1
      %s247 = scalar_select %p246, %s20, 1
      %s248 = smul.addr %s247, 4
      %s249 = scalar_lea.vmem %s3, %s248
      %p250 = pneg %p159
      %p251 = pneg %p156
      %s252 = smul.u32 32, %s21
      %p253 = scmp.lt.s32.totalorder %s20, 1
      %s254 = scalar_select %p253, %s20, 1
      %p255 = scmp.lt.s32.totalorder %s252, 63
      %s256 = scalar_select %p255, %s252, 63
      %s257 = smul.addr %s254, 64
      %s258 = sadd.s32 %s256, %s257
      %s259 = smul.addr %s258, 8
      %s260 = scalar_lea.vmem %s4, %s259
      %p261 = scmp.lt.s32.totalorder %s20, 1
      %s262 = scalar_select %p261, %s20, 1
      %s263 = scalar_lea.vmem %s0, %s262
      %s264 = smul.u32 2, %s21
      %p265 = scmp.lt.s32.totalorder %s20, 1
      %s266 = scalar_select %p265, %s20, 1
      %p267 = scmp.lt.s32.totalorder %s264, 3
      %s268 = scalar_select %p267, %s264, 3
      %s269 = smul.addr %s266, 4
      %s270 = sadd.s32 %s268, %s269
      %s271 = smul.addr %s270, 8
      %s272 = scalar_lea.vmem %s1, %s271
      %s273 = smul.u32 2, %s21
      %s274 = smul.u32 32, %s21
      %p275 = scmp.lt.s32.totalorder %s20, 1
      %s276 = scalar_select %p275, %s20, 1
      %p277 = scmp.lt.s32.totalorder %s274, 63
      %s278 = scalar_select %p277, %s274, 63
      %s279 = smul.addr %s276, 64
      %s280 = sadd.s32 %s278, %s279
      %s281 = smul.addr %s280, 8
      %s282 = scalar_lea.vmem %s2, %s281
      %s283 = smul.u32 32, %s21
      %p284 = scmp.lt.s32.totalorder %s20, 1
      %s285 = scalar_select %p284, %s20, 1
      %s286 = smul.addr %s285, 4
      %s287 = scalar_lea.vmem %s3, %s286
      %s288 = smul.u32 32, %s21
      %p289 = scmp.lt.s32.totalorder %s20, 1
      %s290 = scalar_select %p289, %s20, 1
      %p291 = scmp.lt.s32.totalorder %s288, 63
      %s292 = scalar_select %p291, %s288, 63
      %s293 = smul.addr %s290, 64
      %s294 = sadd.s32 %s292, %s293
      %s295 = smul.addr %s294, 8
      %s296 = scalar_lea.vmem %s4, %s295
      %s297 = smul.u32 32, %s21
      %p298 = scmp.eq.s32.totalorder %s21, 0
      // Predicated region
      $region33: #{proxy_voxel_conv.1} parent=31 // pred_check
        %p299 = pneg %p298
      $region34: #{proxy_voxel_conv.1} parent=31 // pred_check_branch
        %301 = sbr.rel (%p299) target = $region36
      $region35: #{proxy_voxel_conv.1} parent=31 // pred_region
        %302 = vst [vmem:[#allocation2] sm:$0x1f] 0.0
      $region36: #{proxy_voxel_conv.1} parent=31 // pred_fallthru
        _
      %v303 = vld [vmem:[%s263] sm:$0x1]
      %v304 = vld [vmem:[%s282] sm:$0xff]
      %v305 = vld [vmem:[%s282 + $0x8] sm:$0xff]
      %v306 = vld [vmem:[%s282 + $0x10] sm:$0xff]
      %v307 = vld [vmem:[%s282 + $0x18] sm:$0xff]
      %v308 = vld [vmem:[%s282 + $0x20] sm:$0xff]
      %v309 = vld [vmem:[%s282 + $0x28] sm:$0xff]
      %v310 = vld [vmem:[%s282 + $0x30] sm:$0xff]
      %v311 = vld [vmem:[%s282 + $0x38] sm:$0xff]
      %v312 = vld [vmem:[%s282 + $0x40] sm:$0xff]
      %v313 = vld [vmem:[%s282 + $0x48] sm:$0xff]
      %v314 = vld [vmem:[%s282 + $0x50] sm:$0xff]
      %v315 = vld [vmem:[%s282 + $0x58] sm:$0xff]
      %v316 = vld [vmem:[%s282 + $0x60] sm:$0xff]
      %v317 = vld [vmem:[%s282 + $0x68] sm:$0xff]
      %v318 = vld [vmem:[%s282 + $0x70] sm:$0xff]
      %v319 = vld [vmem:[%s282 + $0x78] sm:$0xff]
      %v320 = vld [vmem:[%s282 + $0x80] sm:$0xff]
      %v321 = vld [vmem:[%s282 + $0x88] sm:$0xff]
      %v322 = vld [vmem:[%s282 + $0x90] sm:$0xff]
      %v323 = vld [vmem:[%s282 + $0x98] sm:$0xff]
      %v324 = vld [vmem:[%s282 + $0xa0] sm:$0xff]
      %v325 = vld [vmem:[%s282 + $0xa8] sm:$0xff]
      %v326 = vld [vmem:[%s282 + $0xb0] sm:$0xff]
      %v327 = vld [vmem:[%s282 + $0xb8] sm:$0xff]
      %v328 = vld [vmem:[%s282 + $0xc0] sm:$0xff]
      %v329 = vld [vmem:[%s282 + $0xc8] sm:$0xff]
      %v330 = vld [vmem:[%s282 + $0xd0] sm:$0xff]
      %v331 = vld [vmem:[%s282 + $0xd8] sm:$0xff]
      %v332 = vld [vmem:[%s282 + $0xe0] sm:$0xff]
      %v333 = vld [vmem:[%s282 + $0xe8] sm:$0xff]
      %v334 = vld [vmem:[%s282 + $0xf0] sm:$0xff]
      %v335 = vld [vmem:[%s282 + $0xf8] sm:$0xff]
      %v337 = vlaneseq
      %v338 = vshrl.u32 %v337, 7
      %v339 = vsub.s32 0, %v338
      %v340 = vrot.slane %v303, %v339
      %v342 = vsub.f32 %v304, %v340
      %v343 = vsub.f32 %v305, %v340
      %v344 = vsub.f32 %v306, %v340
      %v345 = vsub.f32 %v307, %v340
      %v346 = vsub.f32 %v308, %v340
      %v347 = vsub.f32 %v309, %v340
      %v348 = vsub.f32 %v310, %v340
      %v349 = vsub.f32 %v311, %v340
      %v350 = vsub.f32 %v312, %v340
      %v351 = vsub.f32 %v313, %v340
      %v352 = vsub.f32 %v314, %v340
      %v353 = vsub.f32 %v315, %v340
      %v354 = vsub.f32 %v316, %v340
      %v355 = vsub.f32 %v317, %v340
      %v356 = vsub.f32 %v318, %v340
      %v357 = vsub.f32 %v319, %v340
      %v358 = vsub.f32 %v320, %v340
      %v359 = vsub.f32 %v321, %v340
      %v360 = vsub.f32 %v322, %v340
      %v361 = vsub.f32 %v323, %v340
      %v362 = vsub.f32 %v324, %v340
      %v363 = vsub.f32 %v325, %v340
      %v364 = vsub.f32 %v326, %v340
      %v365 = vsub.f32 %v327, %v340
      %v366 = vsub.f32 %v328, %v340
      %v367 = vsub.f32 %v329, %v340
      %v368 = vsub.f32 %v330, %v340
      %v369 = vsub.f32 %v331, %v340
      %v370 = vsub.f32 %v332, %v340
      %v371 = vsub.f32 %v333, %v340
      %v372 = vsub.f32 %v334, %v340
      %v373 = vsub.f32 %v335, %v340
      %374 = vset.pattern.permute.xlu0 3
      %375 = vperm.xlu0 %374, %v340
      %v376 = vpop.permute.xlu0 %375
      %v378 = vmul.f32 %v342, %v376
      %v379 = vmul.f32 %v343, %v376
      %v380 = vmul.f32 %v344, %v376
      %v381 = vmul.f32 %v345, %v376
      %v382 = vmul.f32 %v346, %v376
      %v383 = vmul.f32 %v347, %v376
      %v384 = vmul.f32 %v348, %v376
      %v385 = vmul.f32 %v349, %v376
      %v386 = vmul.f32 %v350, %v376
      %v387 = vmul.f32 %v351, %v376
      %v388 = vmul.f32 %v352, %v376
      %v389 = vmul.f32 %v353, %v376
      %v390 = vmul.f32 %v354, %v376
      %v391 = vmul.f32 %v355, %v376
      %v392 = vmul.f32 %v356, %v376
      %v393 = vmul.f32 %v357, %v376
      %v394 = vmul.f32 %v358, %v376
      %v395 = vmul.f32 %v359, %v376
      %v396 = vmul.f32 %v360, %v376
      %v397 = vmul.f32 %v361, %v376
      %v398 = vmul.f32 %v362, %v376
      %v399 = vmul.f32 %v363, %v376
      %v400 = vmul.f32 %v364, %v376
      %v401 = vmul.f32 %v365, %v376
      %v402 = vmul.f32 %v366, %v376
      %v403 = vmul.f32 %v367, %v376
      %v404 = vmul.f32 %v368, %v376
      %v405 = vmul.f32 %v369, %v376
      %v406 = vmul.f32 %v370, %v376
      %v407 = vmul.f32 %v371, %v376
      %v408 = vmul.f32 %v372, %v376
      %v409 = vmul.f32 %v373, %v376
      %v410 = vadd.f32 %v378, 0.5
      %v411 = vadd.f32 %v379, 0.5
      %v412 = vadd.f32 %v380, 0.5
      %v413 = vadd.f32 %v381, 0.5
      %v414 = vadd.f32 %v382, 0.5
      %v415 = vadd.f32 %v383, 0.5
      %v416 = vadd.f32 %v384, 0.5
      %v417 = vadd.f32 %v385, 0.5
      %v418 = vadd.f32 %v386, 0.5
      %v419 = vadd.f32 %v387, 0.5
      %v420 = vadd.f32 %v388, 0.5
      %v421 = vadd.f32 %v389, 0.5
      %v422 = vadd.f32 %v390, 0.5
      %v423 = vadd.f32 %v391, 0.5
      %v424 = vadd.f32 %v392, 0.5
      %v425 = vadd.f32 %v393, 0.5
      %v426 = vadd.f32 %v394, 0.5
      %v427 = vadd.f32 %v395, 0.5
      %v428 = vadd.f32 %v396, 0.5
      %v429 = vadd.f32 %v397, 0.5
      %v430 = vadd.f32 %v398, 0.5
      %v431 = vadd.f32 %v399, 0.5
      %v432 = vadd.f32 %v400, 0.5
      %v433 = vadd.f32 %v401, 0.5
      %v434 = vadd.f32 %v402, 0.5
      %v435 = vadd.f32 %v403, 0.5
      %v436 = vadd.f32 %v404, 0.5
      %v437 = vadd.f32 %v405, 0.5
      %v438 = vadd.f32 %v406, 0.5
      %v439 = vadd.f32 %v407, 0.5
      %v440 = vadd.f32 %v408, 0.5
      %v441 = vadd.f32 %v409, 0.5
      %v442 = vmul.f32 %v410, 4.0
      %v443 = vmul.f32 %v411, 4.0
      %v444 = vmul.f32 %v412, 4.0
      %v445 = vmul.f32 %v413, 4.0
      %v446 = vmul.f32 %v414, 4.0
      %v447 = vmul.f32 %v415, 4.0
      %v448 = vmul.f32 %v416, 4.0
      %v449 = vmul.f32 %v417, 4.0
      %v450 = vmul.f32 %v418, 4.0
      %v451 = vmul.f32 %v419, 4.0
      %v452 = vmul.f32 %v420, 4.0
      %v453 = vmul.f32 %v421, 4.0
      %v454 = vmul.f32 %v422, 4.0
      %v455 = vmul.f32 %v423, 4.0
      %v456 = vmul.f32 %v424, 4.0
      %v457 = vmul.f32 %v425, 4.0
      %v458 = vmul.f32 %v426, 4.0
      %v459 = vmul.f32 %v427, 4.0
      %v460 = vmul.f32 %v428, 4.0
      %v461 = vmul.f32 %v429, 4.0
      %v462 = vmul.f32 %v430, 4.0
      %v463 = vmul.f32 %v431, 4.0
      %v464 = vmul.f32 %v432, 4.0
      %v465 = vmul.f32 %v433, 4.0
      %v466 = vmul.f32 %v434, 4.0
      %v467 = vmul.f32 %v435, 4.0
      %v468 = vmul.f32 %v436, 4.0
      %v469 = vmul.f32 %v437, 4.0
      %v470 = vmul.f32 %v438, 4.0
      %v471 = vmul.f32 %v439, 4.0
      %v472 = vmul.f32 %v440, 4.0
      %v473 = vmul.f32 %v441, 4.0
      %v474 = vmax.f32 %v442, 0.0
      %v475 = vmax.f32 %v443, 0.0
      %v476 = vmax.f32 %v444, 0.0
      %v477 = vmax.f32 %v445, 0.0
      %v478 = vmax.f32 %v446, 0.0
      %v479 = vmax.f32 %v447, 0.0
      %v480 = vmax.f32 %v448, 0.0
      %v481 = vmax.f32 %v449, 0.0
      %v482 = vmax.f32 %v450, 0.0
      %v483 = vmax.f32 %v451, 0.0
      %v484 = vmax.f32 %v452, 0.0
      %v485 = vmax.f32 %v453, 0.0
      %v486 = vmax.f32 %v454, 0.0
      %v487 = vmax.f32 %v455, 0.0
      %v488 = vmax.f32 %v456, 0.0
      %v489 = vmax.f32 %v457, 0.0
      %v490 = vmax.f32 %v458, 0.0
      %v491 = vmax.f32 %v459, 0.0
      %v492 = vmax.f32 %v460, 0.0
      %v493 = vmax.f32 %v461, 0.0
      %v494 = vmax.f32 %v462, 0.0
      %v495 = vmax.f32 %v463, 0.0
      %v496 = vmax.f32 %v464, 0.0
      %v497 = vmax.f32 %v465, 0.0
      %v498 = vmax.f32 %v466, 0.0
      %v499 = vmax.f32 %v467, 0.0
      %v500 = vmax.f32 %v468, 0.0
      %v501 = vmax.f32 %v469, 0.0
      %v502 = vmax.f32 %v470, 0.0
      %v503 = vmax.f32 %v471, 0.0
      %v504 = vmax.f32 %v472, 0.0
      %v505 = vmax.f32 %v473, 0.0
      %v506 = vmin.f32 %v474, 3.0
      %v507 = vmin.f32 %v475, 3.0
      %v508 = vmin.f32 %v476, 3.0
      %v509 = vmin.f32 %v477, 3.0
      %v510 = vmin.f32 %v478, 3.0
      %v511 = vmin.f32 %v479, 3.0
      %v512 = vmin.f32 %v480, 3.0
      %v513 = vmin.f32 %v481, 3.0
      %v514 = vmin.f32 %v482, 3.0
      %v515 = vmin.f32 %v483, 3.0
      %v516 = vmin.f32 %v484, 3.0
      %v517 = vmin.f32 %v485, 3.0
      %v518 = vmin.f32 %v486, 3.0
      %v519 = vmin.f32 %v487, 3.0
      %v520 = vmin.f32 %v488, 3.0
      %v521 = vmin.f32 %v489, 3.0
      %v522 = vmin.f32 %v490, 3.0
      %v523 = vmin.f32 %v491, 3.0
      %v524 = vmin.f32 %v492, 3.0
      %v525 = vmin.f32 %v493, 3.0
      %v526 = vmin.f32 %v494, 3.0
      %v527 = vmin.f32 %v495, 3.0
      %v528 = vmin.f32 %v496, 3.0
      %v529 = vmin.f32 %v497, 3.0
      %v530 = vmin.f32 %v498, 3.0
      %v531 = vmin.f32 %v499, 3.0
      %v532 = vmin.f32 %v500, 3.0
      %v533 = vmin.f32 %v501, 3.0
      %v534 = vmin.f32 %v502, 3.0
      %v535 = vmin.f32 %v503, 3.0
      %v536 = vmin.f32 %v504, 3.0
      %v537 = vmin.f32 %v505, 3.0
      %vm538 = vcmask 23552
      %539 = vst.msk [vmem:[%s296] sm:$0xff] %vm538, %v506
      %540 = vst.msk [vmem:[%s296 + $0x8] sm:$0xff] %vm538, %v507
      %541 = vst.msk [vmem:[%s296 + $0x10] sm:$0xff] %vm538, %v508
      %542 = vst.msk [vmem:[%s296 + $0x18] sm:$0xff] %vm538, %v509
      %543 = vst.msk [vmem:[%s296 + $0x20] sm:$0xff] %vm538, %v510
      %544 = vst.msk [vmem:[%s296 + $0x28] sm:$0xff] %vm538, %v511
      %545 = vst.msk [vmem:[%s296 + $0x30] sm:$0xff] %vm538, %v512
      %546 = vst.msk [vmem:[%s296 + $0x38] sm:$0xff] %vm538, %v513
      %547 = vst.msk [vmem:[%s296 + $0x40] sm:$0xff] %vm538, %v514
      %548 = vst.msk [vmem:[%s296 + $0x48] sm:$0xff] %vm538, %v515
      %549 = vst.msk [vmem:[%s296 + $0x50] sm:$0xff] %vm538, %v516
      %550 = vst.msk [vmem:[%s296 + $0x58] sm:$0xff] %vm538, %v517
      %551 = vst.msk [vmem:[%s296 + $0x60] sm:$0xff] %vm538, %v518
      %552 = vst.msk [vmem:[%s296 + $0x68] sm:$0xff] %vm538, %v519
      %553 = vst.msk [vmem:[%s296 + $0x70] sm:$0xff] %vm538, %v520
      %554 = vst.msk [vmem:[%s296 + $0x78] sm:$0xff] %vm538, %v521
      %555 = vst.msk [vmem:[%s296 + $0x80] sm:$0xff] %vm538, %v522
      %556 = vst.msk [vmem:[%s296 + $0x88] sm:$0xff] %vm538, %v523
      %557 = vst.msk [vmem:[%s296 + $0x90] sm:$0xff] %vm538, %v524
      %558 = vst.msk [vmem:[%s296 + $0x98] sm:$0xff] %vm538, %v525
      %559 = vst.msk [vmem:[%s296 + $0xa0] sm:$0xff] %vm538, %v526
      %560 = vst.msk [vmem:[%s296 + $0xa8] sm:$0xff] %vm538, %v527
      %561 = vst.msk [vmem:[%s296 + $0xb0] sm:$0xff] %vm538, %v528
      %562 = vst.msk [vmem:[%s296 + $0xb8] sm:$0xff] %vm538, %v529
      %563 = vst.msk [vmem:[%s296 + $0xc0] sm:$0xff] %vm538, %v530
      %564 = vst.msk [vmem:[%s296 + $0xc8] sm:$0xff] %vm538, %v531
      %565 = vst.msk [vmem:[%s296 + $0xd0] sm:$0xff] %vm538, %v532
      %566 = vst.msk [vmem:[%s296 + $0xd8] sm:$0xff] %vm538, %v533
      %567 = vst.msk [vmem:[%s296 + $0xe0] sm:$0xff] %vm538, %v534
      %568 = vst.msk [vmem:[%s296 + $0xe8] sm:$0xff] %vm538, %v535
      %569 = vst.msk [vmem:[%s296 + $0xf0] sm:$0xff] %vm538, %v536
      %570 = vst.msk [vmem:[%s296 + $0xf8] sm:$0xff] %vm538, %v537
      %v571 = vcvt.f32.s32.ties.to.even %v506
      %v572 = vcvt.f32.s32.ties.to.even %v507
      %v573 = vcvt.f32.s32.ties.to.even %v508
      %v574 = vcvt.f32.s32.ties.to.even %v509
      %v575 = vcvt.f32.s32.ties.to.even %v510
      %v576 = vcvt.f32.s32.ties.to.even %v511
      %v577 = vcvt.f32.s32.ties.to.even %v512
      %v578 = vcvt.f32.s32.ties.to.even %v513
      %v579 = vcvt.f32.s32.ties.to.even %v514
      %v580 = vcvt.f32.s32.ties.to.even %v515
      %v581 = vcvt.f32.s32.ties.to.even %v516
      %v582 = vcvt.f32.s32.ties.to.even %v517
      %v583 = vcvt.f32.s32.ties.to.even %v518
      %v584 = vcvt.f32.s32.ties.to.even %v519
      %v585 = vcvt.f32.s32.ties.to.even %v520
      %v586 = vcvt.f32.s32.ties.to.even %v521
      %v587 = vcvt.f32.s32.ties.to.even %v522
      %v588 = vcvt.f32.s32.ties.to.even %v523
      %v589 = vcvt.f32.s32.ties.to.even %v524
      %v590 = vcvt.f32.s32.ties.to.even %v525
      %v591 = vcvt.f32.s32.ties.to.even %v526
      %v592 = vcvt.f32.s32.ties.to.even %v527
      %v593 = vcvt.f32.s32.ties.to.even %v528
      %v594 = vcvt.f32.s32.ties.to.even %v529
      %v595 = vcvt.f32.s32.ties.to.even %v530
      %v596 = vcvt.f32.s32.ties.to.even %v531
      %v597 = vcvt.f32.s32.ties.to.even %v532
      %v598 = vcvt.f32.s32.ties.to.even %v533
      %v599 = vcvt.f32.s32.ties.to.even %v534
      %v600 = vcvt.f32.s32.ties.to.even %v535
      %v601 = vcvt.f32.s32.ties.to.even %v536
      %v602 = vcvt.f32.s32.ties.to.even %v537
      %v603 = vmul.u32 %v571, 16
      %v604 = vmul.u32 %v572, 16
      %v605 = vmul.u32 %v573, 16
      %v606 = vmul.u32 %v574, 16
      %v607 = vmul.u32 %v575, 16
      %v608 = vmul.u32 %v576, 16
      %v609 = vmul.u32 %v577, 16
      %v610 = vmul.u32 %v578, 16
      %v611 = vmul.u32 %v579, 16
      %v612 = vmul.u32 %v580, 16
      %v613 = vmul.u32 %v581, 16
      %v614 = vmul.u32 %v582, 16
      %v615 = vmul.u32 %v583, 16
      %v616 = vmul.u32 %v584, 16
      %v617 = vmul.u32 %v585, 16
      %v618 = vmul.u32 %v586, 16
      %v619 = vmul.u32 %v587, 16
      %v620 = vmul.u32 %v588, 16
      %v621 = vmul.u32 %v589, 16
      %v622 = vmul.u32 %v590, 16
      %v623 = vmul.u32 %v591, 16
      %v624 = vmul.u32 %v592, 16
      %v625 = vmul.u32 %v593, 16
      %v626 = vmul.u32 %v594, 16
      %v627 = vmul.u32 %v595, 16
      %v628 = vmul.u32 %v596, 16
      %v629 = vmul.u32 %v597, 16
      %v630 = vmul.u32 %v598, 16
      %v631 = vmul.u32 %v599, 16
      %v632 = vmul.u32 %v600, 16
      %v633 = vmul.u32 %v601, 16
      %v634 = vmul.u32 %v602, 16
      %v635 = vmul.u32 %v571, 4
      %v636 = vmul.u32 %v572, 4
      %v637 = vmul.u32 %v573, 4
      %v638 = vmul.u32 %v574, 4
      %v639 = vmul.u32 %v575, 4
      %v640 = vmul.u32 %v576, 4
      %v641 = vmul.u32 %v577, 4
      %v642 = vmul.u32 %v578, 4
      %v643 = vmul.u32 %v579, 4
      %v644 = vmul.u32 %v580, 4
      %v645 = vmul.u32 %v581, 4
      %v646 = vmul.u32 %v582, 4
      %v647 = vmul.u32 %v583, 4
      %v648 = vmul.u32 %v584, 4
      %v649 = vmul.u32 %v585, 4
      %v650 = vmul.u32 %v586, 4
      %v651 = vmul.u32 %v587, 4
      %v652 = vmul.u32 %v588, 4
      %v653 = vmul.u32 %v589, 4
      %v654 = vmul.u32 %v590, 4
      %v655 = vmul.u32 %v591, 4
      %v656 = vmul.u32 %v592, 4
      %v657 = vmul.u32 %v593, 4
      %v658 = vmul.u32 %v594, 4
      %v659 = vmul.u32 %v595, 4
      %v660 = vmul.u32 %v596, 4
      %v661 = vmul.u32 %v597, 4
      %v662 = vmul.u32 %v598, 4
      %v663 = vmul.u32 %v599, 4
      %v664 = vmul.u32 %v600, 4
      %v665 = vmul.u32 %v601, 4
      %v666 = vmul.u32 %v602, 4
      %667 = vrot.lane.b32.xlu0 %v635, 127
      %v668 = vpop.permute.xlu0 %667
      %669 = vrot.lane.b32.xlu0 %v636, 127
      %v670 = vpop.permute.xlu0 %669
      %671 = vrot.lane.b32.xlu0 %v637, 127
      %v672 = vpop.permute.xlu0 %671
      %673 = vrot.lane.b32.xlu0 %v638, 127
      %v674 = vpop.permute.xlu0 %673
      %675 = vrot.lane.b32.xlu0 %v639, 127
      %v676 = vpop.permute.xlu0 %675
      %677 = vrot.lane.b32.xlu0 %v640, 127
      %v678 = vpop.permute.xlu0 %677
      %679 = vrot.lane.b32.xlu0 %v641, 127
      %v680 = vpop.permute.xlu0 %679
      %681 = vrot.lane.b32.xlu0 %v642, 127
      %v682 = vpop.permute.xlu0 %681
      %683 = vrot.lane.b32.xlu0 %v643, 127
      %v684 = vpop.permute.xlu0 %683
      %685 = vrot.lane.b32.xlu0 %v644, 127
      %v686 = vpop.permute.xlu0 %685
      %687 = vrot.lane.b32.xlu0 %v645, 127
      %v688 = vpop.permute.xlu0 %687
      %689 = vrot.lane.b32.xlu0 %v646, 127
      %v690 = vpop.permute.xlu0 %689
      %691 = vrot.lane.b32.xlu0 %v647, 127
      %v692 = vpop.permute.xlu0 %691
      %693 = vrot.lane.b32.xlu0 %v648, 127
      %v694 = vpop.permute.xlu0 %693
      %695 = vrot.lane.b32.xlu0 %v649, 127
      %v696 = vpop.permute.xlu0 %695
      %697 = vrot.lane.b32.xlu0 %v650, 127
      %v698 = vpop.permute.xlu0 %697
      %699 = vrot.lane.b32.xlu0 %v651, 127
      %v700 = vpop.permute.xlu0 %699
      %701 = vrot.lane.b32.xlu0 %v652, 127
      %v702 = vpop.permute.xlu0 %701
      %703 = vrot.lane.b32.xlu0 %v653, 127
      %v704 = vpop.permute.xlu0 %703
      %705 = vrot.lane.b32.xlu0 %v654, 127
      %v706 = vpop.permute.xlu0 %705
      %707 = vrot.lane.b32.xlu0 %v655, 127
      %v708 = vpop.permute.xlu0 %707
      %709 = vrot.lane.b32.xlu0 %v656, 127
      %v710 = vpop.permute.xlu0 %709
      %711 = vrot.lane.b32.xlu0 %v657, 127
      %v712 = vpop.permute.xlu0 %711
      %713 = vrot.lane.b32.xlu0 %v658, 127
      %v714 = vpop.permute.xlu0 %713
      %715 = vrot.lane.b32.xlu0 %v659, 127
      %v716 = vpop.permute.xlu0 %715
      %717 = vrot.lane.b32.xlu0 %v660, 127
      %v718 = vpop.permute.xlu0 %717
      %719 = vrot.lane.b32.xlu0 %v661, 127
      %v720 = vpop.permute.xlu0 %719
      %721 = vrot.lane.b32.xlu0 %v662, 127
      %v722 = vpop.permute.xlu0 %721
      %723 = vrot.lane.b32.xlu0 %v663, 127
      %v724 = vpop.permute.xlu0 %723
      %725 = vrot.lane.b32.xlu0 %v664, 127
      %v726 = vpop.permute.xlu0 %725
      %727 = vrot.lane.b32.xlu0 %v665, 127
      %v728 = vpop.permute.xlu0 %727
      %729 = vrot.lane.b32.xlu0 %v666, 127
      %v730 = vpop.permute.xlu0 %729
      %v731 = vadd.s32 %v603, %v668
      %v732 = vadd.s32 %v604, %v670
      %v733 = vadd.s32 %v605, %v672
      %v734 = vadd.s32 %v606, %v674
      %v735 = vadd.s32 %v607, %v676
      %v736 = vadd.s32 %v608, %v678
      %v737 = vadd.s32 %v609, %v680
      %v738 = vadd.s32 %v610, %v682
      %v739 = vadd.s32 %v611, %v684
      %v740 = vadd.s32 %v612, %v686
      %v741 = vadd.s32 %v613, %v688
      %v742 = vadd.s32 %v614, %v690
      %v743 = vadd.s32 %v615, %v692
      %v744 = vadd.s32 %v616, %v694
      %v745 = vadd.s32 %v617, %v696
      %v746 = vadd.s32 %v618, %v698
      %v747 = vadd.s32 %v619, %v700
      %v748 = vadd.s32 %v620, %v702
      %v749 = vadd.s32 %v621, %v704
      %v750 = vadd.s32 %v622, %v706
      %v751 = vadd.s32 %v623, %v708
      %v752 = vadd.s32 %v624, %v710
      %v753 = vadd.s32 %v625, %v712
      %v754 = vadd.s32 %v626, %v714
      %v755 = vadd.s32 %v627, %v716
      %v756 = vadd.s32 %v628, %v718
      %v757 = vadd.s32 %v629, %v720
      %v758 = vadd.s32 %v630, %v722
      %v759 = vadd.s32 %v631, %v724
      %v760 = vadd.s32 %v632, %v726
      %v761 = vadd.s32 %v633, %v728
      %v762 = vadd.s32 %v634, %v730
      %763 = vrot.lane.b32.xlu0 %v571, 126
      %v764 = vpop.permute.xlu0 %763
      %765 = vrot.lane.b32.xlu0 %v572, 126
      %v766 = vpop.permute.xlu0 %765
      %767 = vrot.lane.b32.xlu0 %v573, 126
      %v768 = vpop.permute.xlu0 %767
      %769 = vrot.lane.b32.xlu0 %v574, 126
      %v770 = vpop.permute.xlu0 %769
      %771 = vrot.lane.b32.xlu0 %v575, 126
      %v772 = vpop.permute.xlu0 %771
      %773 = vrot.lane.b32.xlu0 %v576, 126
      %v774 = vpop.permute.xlu0 %773
      %775 = vrot.lane.b32.xlu0 %v577, 126
      %v776 = vpop.permute.xlu0 %775
      %777 = vrot.lane.b32.xlu0 %v578, 126
      %v778 = vpop.permute.xlu0 %777
      %779 = vrot.lane.b32.xlu0 %v579, 126
      %v780 = vpop.permute.xlu0 %779
      %781 = vrot.lane.b32.xlu0 %v580, 126
      %v782 = vpop.permute.xlu0 %781
      %783 = vrot.lane.b32.xlu0 %v581, 126
      %v784 = vpop.permute.xlu0 %783
      %785 = vrot.lane.b32.xlu0 %v582, 126
      %v786 = vpop.permute.xlu0 %785
      %787 = vrot.lane.b32.xlu0 %v583, 126
      %v788 = vpop.permute.xlu0 %787
      %789 = vrot.lane.b32.xlu0 %v584, 126
      %v790 = vpop.permute.xlu0 %789
      %791 = vrot.lane.b32.xlu0 %v585, 126
      %v792 = vpop.permute.xlu0 %791
      %793 = vrot.lane.b32.xlu0 %v586, 126
      %v794 = vpop.permute.xlu0 %793
      %795 = vrot.lane.b32.xlu0 %v587, 126
      %v796 = vpop.permute.xlu0 %795
      %797 = vrot.lane.b32.xlu0 %v588, 126
      %v798 = vpop.permute.xlu0 %797
      %799 = vrot.lane.b32.xlu0 %v589, 126
      %v800 = vpop.permute.xlu0 %799
      %801 = vrot.lane.b32.xlu0 %v590, 126
      %v802 = vpop.permute.xlu0 %801
      %803 = vrot.lane.b32.xlu0 %v591, 126
      %v804 = vpop.permute.xlu0 %803
      %805 = vrot.lane.b32.xlu0 %v592, 126
      %v806 = vpop.permute.xlu0 %805
      %807 = vrot.lane.b32.xlu0 %v593, 126
      %v808 = vpop.permute.xlu0 %807
      %809 = vrot.lane.b32.xlu0 %v594, 126
      %v810 = vpop.permute.xlu0 %809
      %811 = vrot.lane.b32.xlu0 %v595, 126
      %v812 = vpop.permute.xlu0 %811
      %813 = vrot.lane.b32.xlu0 %v596, 126
      %v814 = vpop.permute.xlu0 %813
      %815 = vrot.lane.b32.xlu0 %v597, 126
      %v816 = vpop.permute.xlu0 %815
      %817 = vrot.lane.b32.xlu0 %v598, 126
      %v818 = vpop.permute.xlu0 %817
      %819 = vrot.lane.b32.xlu0 %v599, 126
      %v820 = vpop.permute.xlu0 %819
      %821 = vrot.lane.b32.xlu0 %v600, 126
      %v822 = vpop.permute.xlu0 %821
      %823 = vrot.lane.b32.xlu0 %v601, 126
      %v824 = vpop.permute.xlu0 %823
      %825 = vrot.lane.b32.xlu0 %v602, 126
      %v826 = vpop.permute.xlu0 %825
      %v827 = vadd.s32 %v731, %v764
      %v828 = vadd.s32 %v732, %v766
      %v829 = vadd.s32 %v733, %v768
      %v830 = vadd.s32 %v734, %v770
      %v831 = vadd.s32 %v735, %v772
      %v832 = vadd.s32 %v736, %v774
      %v833 = vadd.s32 %v737, %v776
      %v834 = vadd.s32 %v738, %v778
      %v835 = vadd.s32 %v739, %v780
      %v836 = vadd.s32 %v740, %v782
      %v837 = vadd.s32 %v741, %v784
      %v838 = vadd.s32 %v742, %v786
      %v839 = vadd.s32 %v743, %v788
      %v840 = vadd.s32 %v744, %v790
      %v841 = vadd.s32 %v745, %v792
      %v842 = vadd.s32 %v746, %v794
      %v843 = vadd.s32 %v747, %v796
      %v844 = vadd.s32 %v748, %v798
      %v845 = vadd.s32 %v749, %v800
      %v846 = vadd.s32 %v750, %v802
      %v847 = vadd.s32 %v751, %v804
      %v848 = vadd.s32 %v752, %v806
      %v849 = vadd.s32 %v753, %v808
      %v850 = vadd.s32 %v754, %v810
      %v851 = vadd.s32 %v755, %v812
      %v852 = vadd.s32 %v756, %v814
      %v853 = vadd.s32 %v757, %v816
      %v854 = vadd.s32 %v758, %v818
      %v855 = vadd.s32 %v759, %v820
      %v856 = vadd.s32 %v760, %v822
      %v857 = vadd.s32 %v761, %v824
      %v858 = vadd.s32 %v762, %v826
      %v859 = vlaneseq
      %v860 = vand.u32 %v859, 127
      %v861 = vld [vmem:[%s272] sm:$0x1f]
      %v862 = vld [vmem:[%s272 + $0x8] sm:$0x1f]
      %863 = vset.pattern.permute.xlu0 0
      %864 = vperm.xlu0 %863, %v827
      %v865 = vpop.permute.xlu0 %864
      %866 = vset.pattern.permute.xlu0 0
      %867 = vperm.xlu0 %866, %v828
      %v868 = vpop.permute.xlu0 %867
      %869 = vset.pattern.permute.xlu0 0
      %870 = vperm.xlu0 %869, %v829
      %v871 = vpop.permute.xlu0 %870
      %872 = vset.pattern.permute.xlu0 0
      %873 = vperm.xlu0 %872, %v830
      %v874 = vpop.permute.xlu0 %873
      %875 = vset.pattern.permute.xlu0 0
      %876 = vperm.xlu0 %875, %v831
      %v877 = vpop.permute.xlu0 %876
      %878 = vset.pattern.permute.xlu0 0
      %879 = vperm.xlu0 %878, %v832
      %v880 = vpop.permute.xlu0 %879
      %881 = vset.pattern.permute.xlu0 0
      %882 = vperm.xlu0 %881, %v833
      %v883 = vpop.permute.xlu0 %882
      %884 = vset.pattern.permute.xlu0 0
      %885 = vperm.xlu0 %884, %v834
      %v886 = vpop.permute.xlu0 %885
      %887 = vset.pattern.permute.xlu0 0
      %888 = vperm.xlu0 %887, %v835
      %v889 = vpop.permute.xlu0 %888
      %890 = vset.pattern.permute.xlu0 0
      %891 = vperm.xlu0 %890, %v836
      %v892 = vpop.permute.xlu0 %891
      %893 = vset.pattern.permute.xlu0 0
      %894 = vperm.xlu0 %893, %v837
      %v895 = vpop.permute.xlu0 %894
      %896 = vset.pattern.permute.xlu0 0
      %897 = vperm.xlu0 %896, %v838
      %v898 = vpop.permute.xlu0 %897
      %899 = vset.pattern.permute.xlu0 0
      %900 = vperm.xlu0 %899, %v839
      %v901 = vpop.permute.xlu0 %900
      %902 = vset.pattern.permute.xlu0 0
      %903 = vperm.xlu0 %902, %v840
      %v904 = vpop.permute.xlu0 %903
      %905 = vset.pattern.permute.xlu0 0
      %906 = vperm.xlu0 %905, %v841
      %v907 = vpop.permute.xlu0 %906
      %908 = vset.pattern.permute.xlu0 0
      %909 = vperm.xlu0 %908, %v842
      %v910 = vpop.permute.xlu0 %909
      %911 = vset.pattern.permute.xlu0 0
      %912 = vperm.xlu0 %911, %v843
      %v913 = vpop.permute.xlu0 %912
      %914 = vset.pattern.permute.xlu0 0
      %915 = vperm.xlu0 %914, %v844
      %v916 = vpop.permute.xlu0 %915
      %917 = vset.pattern.permute.xlu0 0
      %918 = vperm.xlu0 %917, %v845
      %v919 = vpop.permute.xlu0 %918
      %920 = vset.pattern.permute.xlu0 0
      %921 = vperm.xlu0 %920, %v846
      %v922 = vpop.permute.xlu0 %921
      %923 = vset.pattern.permute.xlu0 0
      %924 = vperm.xlu0 %923, %v847
      %v925 = vpop.permute.xlu0 %924
      %926 = vset.pattern.permute.xlu0 0
      %927 = vperm.xlu0 %926, %v848
      %v928 = vpop.permute.xlu0 %927
      %929 = vset.pattern.permute.xlu0 0
      %930 = vperm.xlu0 %929, %v849
      %v931 = vpop.permute.xlu0 %930
      %932 = vset.pattern.permute.xlu0 0
      %933 = vperm.xlu0 %932, %v850
      %v934 = vpop.permute.xlu0 %933
      %935 = vset.pattern.permute.xlu0 0
      %936 = vperm.xlu0 %935, %v851
      %v937 = vpop.permute.xlu0 %936
      %938 = vset.pattern.permute.xlu0 0
      %939 = vperm.xlu0 %938, %v852
      %v940 = vpop.permute.xlu0 %939
      %941 = vset.pattern.permute.xlu0 0
      %942 = vperm.xlu0 %941, %v853
      %v943 = vpop.permute.xlu0 %942
      %944 = vset.pattern.permute.xlu0 0
      %945 = vperm.xlu0 %944, %v854
      %v946 = vpop.permute.xlu0 %945
      %947 = vset.pattern.permute.xlu0 0
      %948 = vperm.xlu0 %947, %v855
      %v949 = vpop.permute.xlu0 %948
      %950 = vset.pattern.permute.xlu0 0
      %951 = vperm.xlu0 %950, %v856
      %v952 = vpop.permute.xlu0 %951
      %953 = vset.pattern.permute.xlu0 0
      %954 = vperm.xlu0 %953, %v857
      %v955 = vpop.permute.xlu0 %954
      %956 = vset.pattern.permute.xlu0 0
      %957 = vperm.xlu0 %956, %v858
      %v958 = vpop.permute.xlu0 %957
      %vm959 = vcmp.eq.s32.totalorder %v860, %v865
      %vm960 = vcmp.eq.s32.totalorder %v860, %v868
      %vm961 = vcmp.eq.s32.totalorder %v860, %v871
      %vm962 = vcmp.eq.s32.totalorder %v860, %v874
      %vm963 = vcmp.eq.s32.totalorder %v860, %v877
      %vm964 = vcmp.eq.s32.totalorder %v860, %v880
      %vm965 = vcmp.eq.s32.totalorder %v860, %v883
      %vm966 = vcmp.eq.s32.totalorder %v860, %v886
      %vm967 = vcmp.eq.s32.totalorder %v860, %v889
      %vm968 = vcmp.eq.s32.totalorder %v860, %v892
      %vm969 = vcmp.eq.s32.totalorder %v860, %v895
      %vm970 = vcmp.eq.s32.totalorder %v860, %v898
      %vm971 = vcmp.eq.s32.totalorder %v860, %v901
      %vm972 = vcmp.eq.s32.totalorder %v860, %v904
      %vm973 = vcmp.eq.s32.totalorder %v860, %v907
      %vm974 = vcmp.eq.s32.totalorder %v860, %v910
      %vm975 = vcmp.eq.s32.totalorder %v860, %v913
      %vm976 = vcmp.eq.s32.totalorder %v860, %v916
      %vm977 = vcmp.eq.s32.totalorder %v860, %v919
      %vm978 = vcmp.eq.s32.totalorder %v860, %v922
      %vm979 = vcmp.eq.s32.totalorder %v860, %v925
      %vm980 = vcmp.eq.s32.totalorder %v860, %v928
      %vm981 = vcmp.eq.s32.totalorder %v860, %v931
      %vm982 = vcmp.eq.s32.totalorder %v860, %v934
      %vm983 = vcmp.eq.s32.totalorder %v860, %v937
      %vm984 = vcmp.eq.s32.totalorder %v860, %v940
      %vm985 = vcmp.eq.s32.totalorder %v860, %v943
      %vm986 = vcmp.eq.s32.totalorder %v860, %v946
      %vm987 = vcmp.eq.s32.totalorder %v860, %v949
      %vm988 = vcmp.eq.s32.totalorder %v860, %v952
      %vm989 = vcmp.eq.s32.totalorder %v860, %v955
      %vm990 = vcmp.eq.s32.totalorder %v860, %v958
      %v991 = vsel %vm959, 1, 0
      %v992 = vsel %vm960, 1, 0
      %v993 = vsel %vm961, 1, 0
      %v994 = vsel %vm962, 1, 0
      %v995 = vsel %vm963, 1, 0
      %v996 = vsel %vm964, 1, 0
      %v997 = vsel %vm965, 1, 0
      %v998 = vsel %vm966, 1, 0
      %v999 = vsel %vm967, 1, 0
      %v1000 = vsel %vm968, 1, 0
      %v1001 = vsel %vm969, 1, 0
      %v1002 = vsel %vm970, 1, 0
      %v1003 = vsel %vm971, 1, 0
      %v1004 = vsel %vm972, 1, 0
      %v1005 = vsel %vm973, 1, 0
      %v1006 = vsel %vm974, 1, 0
      %v1007 = vsel %vm975, 1, 0
      %v1008 = vsel %vm976, 1, 0
      %v1009 = vsel %vm977, 1, 0
      %v1010 = vsel %vm978, 1, 0
      %v1011 = vsel %vm979, 1, 0
      %v1012 = vsel %vm980, 1, 0
      %v1013 = vsel %vm981, 1, 0
      %v1014 = vsel %vm982, 1, 0
      %v1015 = vsel %vm983, 1, 0
      %v1016 = vsel %vm984, 1, 0
      %v1017 = vsel %vm985, 1, 0
      %v1018 = vsel %vm986, 1, 0
      %v1019 = vsel %vm987, 1, 0
      %v1020 = vsel %vm988, 1, 0
      %v1021 = vsel %vm989, 1, 0
      %v1022 = vsel %vm990, 1, 0
      %v1023 = vcvt.s32.f32 %v991
      %v1024 = vcvt.s32.f32 %v992
      %v1025 = vcvt.s32.f32 %v993
      %v1026 = vcvt.s32.f32 %v994
      %v1027 = vcvt.s32.f32 %v995
      %v1028 = vcvt.s32.f32 %v996
      %v1029 = vcvt.s32.f32 %v997
      %v1030 = vcvt.s32.f32 %v998
      %v1031 = vcvt.s32.f32 %v999
      %v1032 = vcvt.s32.f32 %v1000
      %v1033 = vcvt.s32.f32 %v1001
      %v1034 = vcvt.s32.f32 %v1002
      %v1035 = vcvt.s32.f32 %v1003
      %v1036 = vcvt.s32.f32 %v1004
      %v1037 = vcvt.s32.f32 %v1005
      %v1038 = vcvt.s32.f32 %v1006
      %v1039 = vcvt.s32.f32 %v1007
      %v1040 = vcvt.s32.f32 %v1008
      %v1041 = vcvt.s32.f32 %v1009
      %v1042 = vcvt.s32.f32 %v1010
      %v1043 = vcvt.s32.f32 %v1011
      %v1044 = vcvt.s32.f32 %v1012
      %v1045 = vcvt.s32.f32 %v1013
      %v1046 = vcvt.s32.f32 %v1014
      %v1047 = vcvt.s32.f32 %v1015
      %v1048 = vcvt.s32.f32 %v1016
      %v1049 = vcvt.s32.f32 %v1017
      %v1050 = vcvt.s32.f32 %v1018
      %v1051 = vcvt.s32.f32 %v1019
      %v1052 = vcvt.s32.f32 %v1020
      %v1053 = vcvt.s32.f32 %v1021
      %v1054 = vcvt.s32.f32 %v1022
      %v1055 = vld [vmem:[#allocation2] sm:$0x1f]
      %1056 = vmatprep.subr.mxu0 0.0
      %1057 = vmatpush1.msra.mxu0 %v1038
      %1058 = vmatprep.subr.mxu0 0.0
      %1059 = vmatpush1.msra.mxu0 %v1037
      %1060 = vmatprep.subr.mxu0 0.0
      %1061 = vmatpush1.msra.mxu0 %v1036
      %1062 = vmatprep.subr.mxu0 0.0
      %1063 = vmatpush1.msra.mxu0 %v1035
      %1064 = vmatprep.subr.mxu0 0.0
      %1065 = vmatpush1.msra.mxu0 %v1034
      %1066 = vmatprep.subr.mxu0 0.0
      %1067 = vmatpush1.msra.mxu0 %v1033
      %1068 = vmatprep.subr.mxu0 0.0
      %1069 = vmatpush1.msra.mxu0 %v1032
      %1070 = vmatprep.subr.mxu0 0.0
      %1071 = vmatpush1.msra.mxu0 %v1031
      %1072 = vmatprep.subr.mxu0 0.0
      %1073 = vmatpush1.msra.mxu0 %v1030
      %1074 = vmatprep.subr.mxu0 0.0
      %1075 = vmatpush1.msra.mxu0 %v1029
      %1076 = vmatprep.subr.mxu0 0.0
      %1077 = vmatpush1.msra.mxu0 %v1028
      %1078 = vmatprep.subr.mxu0 0.0
      %1079 = vmatpush1.msra.mxu0 %v1027
      %1080 = vmatprep.subr.mxu0 0.0
      %1081 = vmatpush1.msra.mxu0 %v1026
      %1082 = vmatprep.subr.mxu0 0.0
      %1083 = vmatpush1.msra.mxu0 %v1025
      %1084 = vmatprep.subr.mxu0 0.0
      %1085 = vmatpush1.msra.mxu0 %v1024
      %1086 = vmatprep.subr.mxu0 0.0
      %1087 = vmatpush1.msra.mxu0 %v1023
      %1088 = vmatprep.subr.mxu0 0.0
      %1089 = vmatpush2.msra.mxu0 %v1054
      %1090 = vmatprep.subr.mxu0 0.0
      %1091 = vmatpush2.msra.mxu0 %v1053
      %1092 = vmatprep.subr.mxu0 0.0
      %1093 = vmatpush2.msra.mxu0 %v1052
      %1094 = vmatprep.subr.mxu0 0.0
      %1095 = vmatpush2.msra.mxu0 %v1051
      %1096 = vmatprep.subr.mxu0 0.0
      %1097 = vmatpush2.msra.mxu0 %v1050
      %1098 = vmatprep.subr.mxu0 0.0
      %1099 = vmatpush2.msra.mxu0 %v1049
      %1100 = vmatprep.subr.mxu0 0.0
      %1101 = vmatpush2.msra.mxu0 %v1048
      %1102 = vmatprep.subr.mxu0 0.0
      %1103 = vmatpush2.msra.mxu0 %v1047
      %1104 = vmatprep.subr.mxu0 0.0
      %1105 = vmatpush2.msra.mxu0 %v1046
      %1106 = vmatprep.subr.mxu0 0.0
      %1107 = vmatpush2.msra.mxu0 %v1045
      %1108 = vmatprep.subr.mxu0 0.0
      %1109 = vmatpush2.msra.mxu0 %v1044
      %1110 = vmatprep.subr.mxu0 0.0
      %1111 = vmatpush2.msra.mxu0 %v1043
      %1112 = vmatprep.subr.mxu0 0.0
      %1113 = vmatpush2.msra.mxu0 %v1042
      %1114 = vmatprep.subr.mxu0 0.0
      %1115 = vmatpush2.msra.mxu0 %v1041
      %1116 = vmatprep.subr.mxu0 0.0
      %1117 = vmatpush2.msra.mxu0 %v1040
      %1118 = vmatprep.subr.mxu0 0.0
      %1119 = vmatpush2.msra.mxu0 %v1039
      %1120 = vmatprep.mubr.f32.mxu0 %v862
      %1121 = vmatmul.mubr.f32.gmra.mxu0 %v861
      %v1122 = vpop.f32.mrf.mxu0
      %v1123 = vadd.f32 0.0, %v1122
      %v1124 = vpop.f32.mrf.mxu0
      %1125 = vdwg.mxu0
      %v1126 = vadd.f32 %v1055, %v1123
      %1127 = vst [vmem:[#allocation2] sm:$0x1f] %v1126
      %p1128 = scmp.eq.s32.totalorder %s21, 1
      // Predicated region
      $region37: #{proxy_voxel_conv.1} parent=31 // pred_check
        %p1129 = pneg %p1128
      $region38: #{proxy_voxel_conv.1} parent=31 // pred_check_branch
        %1131 = sbr.rel (%p1129) target = $region40
      $region39: #{proxy_voxel_conv.1} parent=31 // pred_region
        %v1132 = vld [vmem:[#allocation2] sm:$0x1f]
        %v1133 = vmax.f32 %v1132, 1.0
        %v1134 = vrcp.pop %v1133
        %v1135 = vlaneseq
        %v1136 = vshrl.u32 %v1135, 7
        %v1137 = vsub.s32 4, %v1136
        %v1138 = vrot.slane %v1134, %v1137
        %v1139 = vmul.f32 %v1132, %v1138
        %1140 = vst [vmem:[%s287] sm:$0xf] %v1139
      $region40: #{proxy_voxel_conv.1} parent=31 // pred_fallthru
        _
      %p1141 = scmp.lt.s32.totalorder %s20, 1
      %s1142 = scalar_select %p1141, %s20, 1
      %s1143 = smul.addr %s1142, 4
      %s1144 = scalar_lea.vmem %s3, %s1143
      %s1145 = smul.u32 32, %s21
      %p1146 = scmp.lt.s32.totalorder %s20, 1
      %s1147 = scalar_select %p1146, %s20, 1
      %p1148 = scmp.lt.s32.totalorder %s1145, 63
      %s1149 = scalar_select %p1148, %s1145, 63
      %s1150 = smul.addr %s1147, 64
      %s1151 = sadd.s32 %s1149, %s1150
      %s1152 = smul.addr %s1151, 8
      %s1153 = scalar_lea.vmem %s4, %s1152
      // Predicated region
      $region41: #{proxy_voxel_conv.1} parent=31 // pred_check
        %p1154 = pneg %p128
      $region42: #{proxy_voxel_conv.1} parent=31 // pred_check_branch
        %1156 = sbr.rel (%p1154) target = $region44
      $region43: #{proxy_voxel_conv.1} parent=31 // pred_region
        _
      $region44: #{proxy_voxel_conv.1} parent=31 // pred_fallthru
        _
      // Predicated region
      $region45: #{proxy_voxel_conv.1} parent=31 // pred_check
        %p1157 = pneg %p156
      $region46: #{proxy_voxel_conv.1} parent=31 // pred_check_branch
        %1159 = sbr.rel (%p1157) target = $region48
      $region47: #{proxy_voxel_conv.1} parent=31 // pred_region
        %s1160 = smul.u32 32, %s21
      $region48: #{proxy_voxel_conv.1} parent=31 // pred_fallthru
        _
    $region32: #{proxy_voxel_conv.1} parent=5 // pred_fallthru
      _
    %p1161 = scmp.le.s32.totalorder 2, %s11
    // Predicated region
    $region49: #{proxy_voxel_conv.1} parent=5 // pred_check
      %p1162 = pneg %p1161
    $region50: #{proxy_voxel_conv.1} parent=5 // pred_check_branch
      %1164 = sbr.rel (%p1162) target = $region52
    $region51: #{proxy_voxel_conv.1} parent=5 // pred_region
      %s1165 = ssub.s32 %s11, 2
      // Predicated region
      $region53: #{proxy_voxel_conv.1} parent=51 // pred_check
        %p1166 = pneg %p134
      $region54: #{proxy_voxel_conv.1} parent=51 // pred_check_branch
        %1168 = sbr.rel (%p1166) target = $region56
      $region55: #{proxy_voxel_conv.1} parent=51 // pred_region
        %p1169 = scmp.lt.s32.totalorder %s22, 1
        %s1170 = scalar_select %p1169, %s22, 1
        %s1171 = smul.addr %s1170, 4
        %s1172 = scalar_lea.vmem %s3, %s1171
      $region56: #{proxy_voxel_conv.1} parent=51 // pred_fallthru
        _
      // Predicated region
      $region57: #{proxy_voxel_conv.1} parent=51 // pred_check
        %p1173 = pneg %p162
      $region58: #{proxy_voxel_conv.1} parent=51 // pred_check_branch
        %1175 = sbr.rel (%p1173) target = $region60
      $region59: #{proxy_voxel_conv.1} parent=51 // pred_region
        %s1176 = smul.u32 32, %s23
        %p1177 = scmp.lt.s32.totalorder %s22, 1
        %s1178 = scalar_select %p1177, %s22, 1
        %p1179 = scmp.lt.s32.totalorder %s1176, 63
        %s1180 = scalar_select %p1179, %s1176, 63
        %s1181 = smul.addr %s1178, 64
        %s1182 = sadd.s32 %s1180, %s1181
        %s1183 = smul.addr %s1182, 8
        %s1184 = scalar_lea.vmem %s4, %s1183
      $region60: #{proxy_voxel_conv.1} parent=51 // pred_fallthru
        _
    $region52: #{proxy_voxel_conv.1} parent=5 // pred_fallthru
      _
  $region6: #{proxy_voxel_conv.1} parent=0 // loop_footer
    %s15 = sadd.s32 1, %s11
  $region7: #{proxy_voxel_conv.1} parent=0 // loop_footer_branch
    %10 = sbr.rel target = $region3
  $region8: #{proxy_voxel_conv.1} parent=0 // loop_exit
    _

</llo_original>
